<compile_context>
chip_gen: v6e
topology: v6e:2x2x1
jax: 0.10.0
libtpu: 0.0.40
codegen_flags: <defaults>
</compile_context>

<pallas_src>
import functools

import jax
import jax.numpy as jnp
from jax.experimental import pallas as pl
from jax.experimental.pallas import tpu as pltpu


def _salt_pepper_kernel(r_ref, x_ref, o_ref, *, t1, t2):
    # r_ref: (Bt, 1, HW) int32 uniform draws in [0, 2^31)
    # x_ref/o_ref: (Bt, C, HW) image blocks
    r = r_ref[...]
    # Noise value per pixel (shared over channels): -1 for pepper, +1 for salt.
    noise_val = jnp.where(r < t1, -1.0, 1.0).astype(x_ref.dtype)
    apply_noise = r < t2                     # pepper or salt
    # Single select per channel; (Bt,1,HW) broadcasts over C.
    o_ref[...] = jnp.where(apply_noise, noise_val, x_ref[...])


def salt_and_pepper(encoded_image, *, ratio, key=None, seed=0):
    """Apply salt-and-pepper noise to an NCHW image batch."""
    B, C, H, W = encoded_image.shape
    HW = H * W
    ratio = float(ratio)

    if key is None:
        key = jax.random.PRNGKey(seed)
    # One draw per (b, h, w); channel dim of size 1 mirrors np.repeat over C.
    bits = jax.random.bits(key, (B, 1, HW), dtype=jnp.uint32)
    rnd = (bits >> jnp.uint32(1)).astype(jnp.int32)  # uniform in [0, 2^31)

    # Integer-domain thresholds: P(r < t1) = ratio, P(t1 <= r < t2) = ratio.
    t1 = min(int(round(ratio * (1 << 31))), (1 << 31) - 1)
    t2 = min(int(round(2.0 * ratio * (1 << 31))), (1 << 31) - 1)

    # Lane-dense view: last dim is H*W (multiple of 128 for typical images).
    x_flat = encoded_image.reshape(B, C, HW)

    # Pack batch elements per grid step up to ~1 MiB of activation per block
    # (this is a purely memory-bound elementwise op; block size is the knob).
    # TODO(synk): add a spatial (H*W) tiling grid axis for very large single
    # images so a block never exceeds v7x's smaller VMEM budget.
    per_b_bytes = C * HW * x_flat.dtype.itemsize
    bt = max(1, min(B, (1 << 20) // max(per_b_bytes, 1)))
    while B % bt:  # keep blocks exact (no partial batch blocks)
        bt -= 1

    kernel = functools.partial(_salt_pepper_kernel, t1=t1, t2=t2)

    out_flat = pl.pallas_call(
        kernel,
        out_shape=jax.ShapeDtypeStruct((B, C, HW), x_flat.dtype),
        grid_spec=pltpu.PrefetchScalarGridSpec(
            num_scalar_prefetch=0,
            grid=(B // bt,),
            in_specs=[
                pl.BlockSpec((bt, 1, HW), lambda i: (i, 0, 0)),
                pl.BlockSpec((bt, C, HW), lambda i: (i, 0, 0)),
            ],
            out_specs=pl.BlockSpec((bt, C, HW), lambda i: (i, 0, 0)),
        ),
        compiler_params=pltpu.CompilerParams(
            dimension_semantics=("parallel",),
        ),
        # Output aliases the (flattened) encoded image buffer.
        input_output_aliases={1: 0},
    )(rnd, x_flat)

    return out_flat.reshape(B, C, H, W)


class SaltAndPepper:
    """JAX/Pallas equivalent of the PyTorch Salt_and_Pepper module.

    __call__ takes and returns a list [encoded_image, cover_image, ...]
    (only element 0 is modified), matching the PyTorch interface.
    """

    def __init__(self, ratio):
        self.ratio = float(ratio)

    def __call__(self, noise_and_cover, key=None, seed=0):
        encoded_image = noise_and_cover[0]
        noised = salt_and_pepper(encoded_image, ratio=self.ratio,
                                 key=key, seed=seed)
        noise_and_cover = list(noise_and_cover)
        noise_and_cover[0] = noised
        return noise_and_cover


if __name__ == "__main__":
    key = jax.random.PRNGKey(0)
    k1, k2, k3 = jax.random.split(key, 3)

    B, C, H, W = 2, 4, 16, 16
    encoded = jax.random.uniform(k1, (B, C, H, W), dtype=jnp.float32,
                                 minval=-0.5, maxval=0.5)
    cover = jax.random.uniform(k2, (B, C, H, W), dtype=jnp.float32)

    layer = SaltAndPepper(ratio=0.1)
    out = layer([encoded, cover], key=k3)
    noised = jax.block_until_ready(out[0])

    assert noised.shape == (B, C, H, W)
    assert noised.dtype == encoded.dtype
    assert bool(jnp.all(jnp.isfinite(noised)))
    # Noise mask must be shared across channels.
    changed = jnp.abs(noised - encoded) > 1e-6
    assert bool(jnp.all(changed == changed[:, :1, :, :]))
    # Every noised pixel is exactly -1 or +1; everything else is unchanged.
    assert bool(jnp.all(jnp.where(changed, jnp.abs(noised) == 1.0, True)))
    assert bool(jnp.all(jnp.where(changed, True, noised == encoded)))

    print("KERNEL_OK")
</pallas_src>

<mosaic_0001>
module attributes {stable_mosaic.version = 11 : i64} {
  func.func @_salt_pepper_kernel(%arg0: i32, %arg1: memref<2x1x256xi32, #tpu.memory_space<vmem>>, %arg2: memref<2x4x256xf32, #tpu.memory_space<vmem>>, %arg3: memref<2x4x256xf32, #tpu.memory_space<vmem>>) attributes {dimension_semantics = [#tpu.dimension_semantics<parallel>], iteration_bounds = array<i64: 1>, scalar_prefetch = 0 : i64, scratch_operands = 0 : i64, tpu.core_type = #tpu.core_type<tc>, window_params = [{transform_indices = @transform_0, window_bounds = array<i64: 2, 1, 256>}, {transform_indices = @transform_1, window_bounds = array<i64: 2, 4, 256>}, {transform_indices = @transform_2, window_bounds = array<i64: 2, 4, 256>}]} {
    %c0 = arith.constant 0 : index
    %c0_0 = arith.constant 0 : index
    %c0_1 = arith.constant 0 : index
    %0 = vector.load %arg1[%c0, %c0_0, %c0_1] : memref<2x1x256xi32, #tpu.memory_space<vmem>>, vector<2x1x256xi32>
    %c214748365_i32 = arith.constant 214748365 : i32
    %1 = vector.broadcast %c214748365_i32 : i32 to vector<2x1x256xi32>
    %2 = arith.cmpi slt, %0, %1 : vector<2x1x256xi32>
    %cst = arith.constant -1.000000e+00 : f32
    %cst_2 = arith.constant 1.000000e+00 : f32
    %3 = vector.broadcast %cst : f32 to vector<2x1x256xf32>
    %4 = vector.broadcast %cst_2 : f32 to vector<2x1x256xf32>
    %5 = arith.select %2, %3, %4 : vector<2x1x256xi1>, vector<2x1x256xf32>
    %c429496730_i32 = arith.constant 429496730 : i32
    %6 = vector.broadcast %c429496730_i32 : i32 to vector<2x1x256xi32>
    %7 = arith.cmpi slt, %0, %6 : vector<2x1x256xi32>
    %c0_3 = arith.constant 0 : index
    %c0_4 = arith.constant 0 : index
    %c0_5 = arith.constant 0 : index
    %8 = vector.load %arg2[%c0_3, %c0_4, %c0_5] : memref<2x4x256xf32, #tpu.memory_space<vmem>>, vector<2x4x256xf32>
    %9 = vector.shape_cast %7 : vector<2x1x256xi1> to vector<2x1x256xi1>
    %10 = vector.broadcast %9 : vector<2x1x256xi1> to vector<2x4x256xi1>
    %11 = vector.shape_cast %5 : vector<2x1x256xf32> to vector<2x1x256xf32>
    %12 = vector.broadcast %11 : vector<2x1x256xf32> to vector<2x4x256xf32>
    %13 = arith.select %10, %12, %8 : vector<2x4x256xi1>, vector<2x4x256xf32>
    %c0_6 = arith.constant 0 : index
    %c0_7 = arith.constant 0 : index
    %c0_8 = arith.constant 0 : index
    %14 = vector.load %arg3[%c0_6, %c0_7, %c0_8] : memref<2x4x256xf32, #tpu.memory_space<vmem>>, vector<2x4x256xf32>
    tpu.vector_store %arg3[%c0_6, %c0_7, %c0_8], %13 {strides = array<i32>} : memref<2x4x256xf32, #tpu.memory_space<vmem>>, vector<2x4x256xf32>,
    return
  }
  func.func @transform_0(%arg0: i32) -> (i32, i32, i32) {
    %c0_i32 = arith.constant 0 : i32
    %c0_i32_0 = arith.constant 0 : i32
    %c0_i32_1 = arith.constant 0 : i32
    return %arg0, %c0_i32, %c0_i32_0 : i32, i32, i32
  }
  func.func @transform_1(%arg0: i32) -> (i32, i32, i32) {
    %c0_i32 = arith.constant 0 : i32
    %c0_i32_0 = arith.constant 0 : i32
    %c0_i32_1 = arith.constant 0 : i32
    return %arg0, %c0_i32, %c0_i32_0 : i32, i32, i32
  }
  func.func @transform_2(%arg0: i32) -> (i32, i32, i32) {
    %c0_i32 = arith.constant 0 : i32
    %c0_i32_0 = arith.constant 0 : i32
    %c0_i32_1 = arith.constant 0 : i32
    return %arg0, %c0_i32, %c0_i32_0 : i32, i32, i32
  }
}

</mosaic_0001>

<llo_original>
// kernel: tpu_custom_call.1
$region0: #{tpu_custom_call.1}
  #allocation0 [shape = 'u32[]', space=smem, size = 0x4, offset = 0x4, fixed_abs, tag = 'smem constant byte address 0x4 - core index']
  #allocation1 [shape = 'u32[144,128]{1,0:T(1,128)}', space=vmem, size = 0x12000, scoped, tag = 'internal scratch']
  %s0 = inlined_call_operand.vmem [shape: s32[2,1,256], index: 0, kind: input, shape index: {}]
  %s1 = inlined_call_operand.hbm [shape: f32[2,4,256], index: 1, kind: input, shape index: {}, may-alias: {1,2}]
  %s2 = inlined_call_operand.hbm [shape: f32[2,4,256], index: 2, kind: output, shape index: {}, may-alias: {1,2}]
  %s3 = sld [smem:[#allocation0]]
  $region22: #{tpu_custom_call.1} parent=0
    _
  %s5 = ssub.s32 1, %s3
  %s6 = scalar_select 0, %s5, %s3
  $region1: #{tpu_custom_call.1} parent=0
    #allocation2 [shape = 'u8[8192]{0}', space=vmem, size = 0x2000, scoped, tag = 'input window, operand 1, single buffered']
    #allocation3 [shape = 's32[1]{0}', space=sflag, size = 0x4, scoped, tag = 'scoped memory for tpu_custom_call.1']
    #allocation4 [shape = 's32[1]{0}', space=sflag, size = 0x4, scoped, tag = 'scoped memory for tpu_custom_call.1']
    #allocation5 [shape = 'u8[8192]{0}', space=vmem, size = 0x2000, scoped, tag = 'output window, operand 0, single buffered']
    %7 = vsyncpa [#allocation3], 0
    %8 = vsyncpa [#allocation4], 0
    // Predicated region
    $region2: #{tpu_custom_call.1} parent=1 // pred_check
      _
    $region3: #{tpu_custom_call.1} parent=1 // pred_check_branch
      %10 = sbr.rel (0) target = $region5
    $region4: #{tpu_custom_call.1} parent=1 // pred_region
      _
    $region5: #{tpu_custom_call.1} parent=1 // pred_fallthru
      _
    // Predicated region
    $region6: #{tpu_custom_call.1} parent=1 // pred_check
      _
    $region7: #{tpu_custom_call.1} parent=1 // pred_check_branch
      %12 = sbr.rel (0) target = $region9
    $region8: #{tpu_custom_call.1} parent=1 // pred_region
      %s14 = ssub.s32 256, 256
      %15 = vsyncadd [#allocation3], %s14
      %s16 = sshll.u32 [#allocation2], 4
      %s17 = int_to_ptr.vmem [resolvable:$true] %s16
      %22 = dma.hbm_to_vmem [thread:$0]  %s1, 256, %s17, [#allocation3], 128, 128, 8
    $region9: #{tpu_custom_call.1} parent=1 // pred_fallthru
      _
    // Predicated region
    $region10: #{tpu_custom_call.1} parent=1 // pred_check
      _
    $region11: #{tpu_custom_call.1} parent=1 // pred_check_branch
      %24 = sbr.rel (0) target = $region13
    $region12: #{tpu_custom_call.1} parent=1 // pred_region
      %25 = dma.done [#allocation3], 256
    $region13: #{tpu_custom_call.1} parent=1 // pred_fallthru
      _
    %v26 = vld [vmem:[%s0] sm:$0x3]
    %v27 = vld [vmem:[%s0 + $0x2] sm:$0x3]
    %vm28 = vcmp.lt.s32.totalorder %v26, 214748365
    %vm29 = vcmp.lt.s32.totalorder %v27, 214748365
    %v30 = vsel %vm28, -1.0, 1.0
    %v31 = vsel %vm29, -1.0, 1.0
    %vm32 = vcmp.lt.s32.totalorder %v26, 429496730
    %vm33 = vcmp.lt.s32.totalorder %v27, 429496730
    %v34 = vld [vmem:[#allocation2] sm:$0xff]
    %v35 = vld [vmem:[#allocation2 + $0x8] sm:$0xff]
    %v36 = vsel %vm32, 1, 0
    %v37 = vsel %vm33, 1, 0
    %v38 = vlaneseq
    %v39 = vshrl.u32 %v38, 7
    %v40 = vsub.s32 0, %v39
    %v41 = vrot.slane %v36, %v40
    %v42 = vlaneseq
    %v43 = vshrl.u32 %v42, 7
    %v44 = vsub.s32 1, %v43
    %v45 = vrot.slane %v36, %v44
    %v46 = vlaneseq
    %v47 = vshrl.u32 %v46, 7
    %v48 = vsub.s32 0, %v47
    %v49 = vrot.slane %v37, %v48
    %v50 = vlaneseq
    %v51 = vshrl.u32 %v50, 7
    %v52 = vsub.s32 1, %v51
    %v53 = vrot.slane %v37, %v52
    %vm54 = vcmp.eq.s32.totalorder %v41, 1
    %vm55 = vcmp.eq.s32.totalorder %v45, 1
    %vm56 = vcmp.eq.s32.totalorder %v49, 1
    %vm57 = vcmp.eq.s32.totalorder %v53, 1
    %v60 = vlaneseq
    %v61 = vshrl.u32 %v60, 7
    %v62 = vsub.s32 0, %v61
    %v63 = vrot.slane %v30, %v62
    %v64 = vlaneseq
    %v65 = vshrl.u32 %v64, 7
    %v66 = vsub.s32 1, %v65
    %v67 = vrot.slane %v30, %v66
    %v68 = vlaneseq
    %v69 = vshrl.u32 %v68, 7
    %v70 = vsub.s32 0, %v69
    %v71 = vrot.slane %v31, %v70
    %v72 = vlaneseq
    %v73 = vshrl.u32 %v72, 7
    %v74 = vsub.s32 1, %v73
    %v75 = vrot.slane %v31, %v74
    %v82 = vcombine.high %v34, %v34
    %v83 = vcombine.high %v35, %v35
    %v86 = vsel %vm54, %v63, %v34
    %v87 = vsel %vm55, %v67, %v82
    %v88 = vsel %vm56, %v71, %v35
    %v89 = vsel %vm57, %v75, %v83
    %v94 = vcombine.low %v86, %v87
    %v95 = vcombine.low %v88, %v89
    %98 = vst [vmem:[#allocation5] sm:$0xff] %v94
    %99 = vst [vmem:[#allocation5 + $0x8] sm:$0xff] %v95
    // Predicated region
    $region14: #{tpu_custom_call.1} parent=1 // pred_check
      _
    $region15: #{tpu_custom_call.1} parent=1 // pred_check_branch
      %101 = sbr.rel (0) target = $region17
    $region16: #{tpu_custom_call.1} parent=1 // pred_region
      %s103 = ssub.s32 256, 256
      %104 = vsyncadd [#allocation4], %s103
      %s105 = sshll.u32 [#allocation5], 4
      %s106 = int_to_ptr.vmem [resolvable:$true] %s105
      %111 = dma.vmem_to_hbm [thread:$0]  %s106, 256, %s2, [#allocation4], 128, 128, 8
    $region17: #{tpu_custom_call.1} parent=1 // pred_fallthru
      _
    // Predicated region
    $region18: #{tpu_custom_call.1} parent=1 // pred_check
      _
    $region19: #{tpu_custom_call.1} parent=1 // pred_check_branch
      %113 = sbr.rel (0) target = $region21
    $region20: #{tpu_custom_call.1} parent=1 // pred_region
      %114 = dma.done [#allocation4], 256
    $region21: #{tpu_custom_call.1} parent=1 // pred_fallthru
      _
    %115 = vsyncpa [#allocation3], 1
    %116 = vsyncpa [#allocation4], 1

</llo_original>
